<compile_context>
chip_gen: v7x
topology: tpu7x:2x2x1
jax: 0.10.0
libtpu: 0.0.40
codegen_flags: <defaults>
</compile_context>

<pallas_src>
import functools
import math

import jax
import jax.numpy as jnp
from jax.experimental import pallas as pl
from jax.experimental.pallas import tpu as pltpu


def _min_sublane(dtype) -> int:
    """Minimum sublane multiple for a dtype: 8 (32-bit), 16 (16-bit), 32 (8-bit)."""
    bits = jnp.dtype(dtype).itemsize * 8
    if bits >= 32:
        return 8
    if bits == 16:
        return 16
    return 32


def _pick_seq_tile(S: int, in_dtype, out_dtype, cap: int = 1024) -> int:
    """Largest sequence tile <= cap that divides S and is a multiple of the
    packing-aware sublane quantum of both the input and output dtypes."""
    if S <= cap:
        return S
    m = max(_min_sublane(in_dtype), _min_sublane(out_dtype))
    ts = cap - (cap % m)
    while ts >= m:
        if S % ts == 0:
            return ts
        ts -= m
    return S  # no aligned divisor: fall back to a single full-extent block


def _taylor_exp_kernel(x_ref, o_ref, *, inv_rrd, inv_r2rd, D):
    # x_ref: (TS, D)   o_ref: (TS, 1 + D + D*D)
    x = x_ref[...].astype(jnp.float32)          # compute in f32 on every gen
    TS = x.shape[0]

    # [ 1 | x/sqrt(sqrt(D)) ] — built once, stored with a single 1+D lane write.
    small = jnp.concatenate(
        [jnp.ones((TS, 1), dtype=jnp.float32), x * inv_rrd], axis=-1
    )
    o_ref[:, 0:1 + D] = small.astype(o_ref.dtype)

    # Second-order features, built directly at D*D lanes:
    #   x2[s, m*D + n] = x[s, m] * x[s, n] / (sqrt(2) * sqrt(D))
    # Scale folded into the D-wide factor before the 16 -> 256 lane expansion.
    xs = x * inv_r2rd                            # (TS, D)
    xa = jnp.repeat(xs, D, axis=-1)              # lane i -> xs[:, i // D]
    xb = jnp.tile(x, (1, D))                     # lane i -> x[:,  i %  D]
    o_ref[:, 1 + D:1 + D + D * D] = (xa * xb).astype(o_ref.dtype)


def taylor_exp(x: jax.Array, *, out_dtype=None, seq_tile_cap: int = 1024) -> jax.Array:
    """Pallas implementation of TaylorExp.forward.

    x: (B, H, S, D)  ->  (B, H, S, 1 + D + D*D)

    out_dtype: optional narrower output dtype (e.g. jnp.bfloat16) for the
    HBM-write-bound materialization; default matches the input dtype (exact
    PyTorch-module semantics).
    """
    B, H, S, D = x.shape
    out_dim = 1 + D + D * D
    out_dtype = x.dtype if out_dtype is None else jnp.dtype(out_dtype)

    rd = math.sqrt(D)
    inv_rrd = 1.0 / math.sqrt(rd)
    inv_r2rd = 1.0 / (math.sqrt(2.0) * rd)

    TS = _pick_seq_tile(S, x.dtype, out_dtype, cap=seq_tile_cap)
    x_flat = x.reshape(B * H, S, D)

    kernel = functools.partial(
        _taylor_exp_kernel, inv_rrd=inv_rrd, inv_r2rd=inv_r2rd, D=D
    )

    out_flat = pl.pallas_call(
        kernel,
        out_shape=jax.ShapeDtypeStruct((B * H, S, out_dim), out_dtype),
        grid_spec=pltpu.PrefetchScalarGridSpec(
            num_scalar_prefetch=0,
            grid=(B * H, S // TS),
            # leading (batch*head) block dim squeezed out of the kernel refs
            in_specs=[pl.BlockSpec((None, TS, D), lambda i, j: (i, j, 0))],
            out_specs=pl.BlockSpec((None, TS, out_dim), lambda i, j: (i, j, 0)),
        ),
        compiler_params=pltpu.CompilerParams(
            dimension_semantics=("parallel", "parallel"),
            vmem_limit_bytes=32 * 1024 * 1024,
        ),
    )(x_flat)

    return out_flat.reshape(B, H, S, out_dim)


def taylor_exp_ref(x: jax.Array) -> jax.Array:
    """Pure-JAX reference mirroring the PyTorch forward exactly."""
    D = x.shape[-1]
    r2 = math.sqrt(2.0)
    rd = math.sqrt(D)
    rrd = math.sqrt(rd)
    x2 = (x[..., :, None] * x[..., None, :]).reshape(*x.shape[:-1], D * D) / r2
    ones = jnp.ones(x[..., :1].shape, dtype=x.dtype)
    return jnp.concatenate([ones, x / rrd, x2 / rd], axis=-1)


if __name__ == "__main__":
    key = jax.random.PRNGKey(0)
    B, H, S, D = 2, 4, 16, 16                   # head_dim = input_dim = 16
    x = jax.random.normal(key, (B, H, S, D), dtype=jnp.float32)

    out = jax.block_until_ready(taylor_exp(x))

    ref = taylor_exp_ref(x)
    assert out.shape == (B, H, S, 1 + D + D * D), out.shape
    assert jnp.allclose(out, ref, atol=1e-5, rtol=1e-5), "mismatch vs reference"

    print("KERNEL_OK")
</pallas_src>

<mosaic_0001>
module attributes {stable_mosaic.version = 11 : i64} {
  func.func @_taylor_exp_kernel(%arg0: i32, %arg1: i32, %arg2: memref<1x16x16xf32, #tpu.memory_space<vmem>>, %arg3: memref<1x16x273xf32, #tpu.memory_space<vmem>>) attributes {dimension_semantics = [#tpu.dimension_semantics<parallel>, #tpu.dimension_semantics<parallel>], iteration_bounds = array<i64: 8, 1>, scalar_prefetch = 0 : i64, scratch_operands = 0 : i64, tpu.core_type = #tpu.core_type<tc>, window_params = [{transform_indices = @transform_0, window_bounds = array<i64: 1, 16, 16>}, {transform_indices = @transform_1, window_bounds = array<i64: 1, 16, 273>}]} {
    %c0 = arith.constant 0 : index
    %c0_0 = arith.constant 0 : index
    %c0_1 = arith.constant 0 : index
    %0 = vector.load %arg2[%c0, %c0_0, %c0_1] : memref<1x16x16xf32, #tpu.memory_space<vmem>>, vector<1x16x16xf32>
    %1 = vector.shape_cast %0 : vector<1x16x16xf32> to vector<16x16xf32>
    %cst = arith.constant 1.000000e+00 : f32
    %2 = vector.broadcast %cst : f32 to vector<16x1xf32>
    %cst_2 = arith.constant 5.000000e-01 : f32
    %3 = vector.broadcast %cst_2 : f32 to vector<16x16xf32>
    %4 = arith.mulf %1, %3 : vector<16x16xf32>
    %5 = tpu.concatenate %2, %4 in 1 : vector<16x1xf32>, vector<16x16xf32> -> vector<16x17xf32>
    %c0_3 = arith.constant 0 : index
    %c0_4 = arith.constant 0 : index
    %c0_5 = arith.constant 0 : index
    %6 = vector.load %arg3[%c0_3, %c0_4, %c0_5] : memref<1x16x273xf32, #tpu.memory_space<vmem>>, vector<1x16x17xf32>
    %7 = vector.shape_cast %6 : vector<1x16x17xf32> to vector<16x17xf32>
    %8 = vector.shape_cast %5 : vector<16x17xf32> to vector<1x16x17xf32>
    tpu.vector_store %arg3[%c0_3, %c0_4, %c0_5], %8 {strides = array<i32>} : memref<1x16x273xf32, #tpu.memory_space<vmem>>, vector<1x16x17xf32>,
    %cst_6 = arith.constant 0.176776692 : f32
    %9 = vector.broadcast %cst_6 : f32 to vector<16x16xf32>
    %10 = arith.mulf %1, %9 : vector<16x16xf32>
    %11 = vector.shape_cast %10 : vector<16x16xf32> to vector<16x16x1xf32>
    %12 = vector.broadcast %11 : vector<16x16x1xf32> to vector<16x16x16xf32>
    %13 = vector.shape_cast %12 : vector<16x16x16xf32> to vector<16x256xf32>
    %14 = tpu.concatenate %1, %1, %1, %1, %1, %1, %1, %1, %1, %1, %1, %1, %1, %1, %1, %1 in 1 : vector<16x16xf32>, vector<16x16xf32>, vector<16x16xf32>, vector<16x16xf32>, vector<16x16xf32>, vector<16x16xf32>, vector<16x16xf32>, vector<16x16xf32>, vector<16x16xf32>, vector<16x16xf32>, vector<16x16xf32>, vector<16x16xf32>, vector<16x16xf32>, vector<16x16xf32>, vector<16x16xf32>, vector<16x16xf32> -> vector<16x256xf32>
    %15 = arith.mulf %13, %14 : vector<16x256xf32>
    %c0_7 = arith.constant 0 : index
    %c0_8 = arith.constant 0 : index
    %c17 = arith.constant 17 : index
    %16 = vector.load %arg3[%c0_7, %c0_8, %c17] : memref<1x16x273xf32, #tpu.memory_space<vmem>>, vector<1x16x256xf32>
    %17 = vector.shape_cast %16 : vector<1x16x256xf32> to vector<16x256xf32>
    %18 = vector.shape_cast %15 : vector<16x256xf32> to vector<1x16x256xf32>
    tpu.vector_store %arg3[%c0_7, %c0_8, %c17], %18 {strides = array<i32>} : memref<1x16x273xf32, #tpu.memory_space<vmem>>, vector<1x16x256xf32>,
    return
  }
  func.func @transform_0(%arg0: i32, %arg1: i32) -> (i32, i32, i32) {
    %c0_i32 = arith.constant 0 : i32
    %c0_i32_0 = arith.constant 0 : i32
    return %arg0, %arg1, %c0_i32 : i32, i32, i32
  }
  func.func @transform_1(%arg0: i32, %arg1: i32) -> (i32, i32, i32) {
    %c0_i32 = arith.constant 0 : i32
    %c0_i32_0 = arith.constant 0 : i32
    return %arg0, %arg1, %c0_i32 : i32, i32, i32
  }
}

</mosaic_0001>

<llo_original>
// kernel: tpu_custom_call.1
$region0: #{tpu_custom_call.1}
  #allocation0 [shape = 'u32[]', space=smem, size = 0x4, offset = 0x4, fixed_abs, tag = 'smem constant byte address 0x4 - core index']
  #allocation1 [shape = 'u32[144,128]{1,0:T(1,128)}', space=vmem, size = 0x12000, scoped, tag = 'internal scratch']
  %s0 = inlined_call_operand.hbm [shape: f32[8,16,16], index: 0, kind: input, shape index: {}]
  %s1 = inlined_call_operand.hbm [shape: f32[8,16,273], index: 1, kind: output, shape index: {}]
  %s2 = sld [smem:[#allocation0]]
  $region41: #{tpu_custom_call.1} parent=0
    _
  %s4 = ssub.s32 1, %s2
  %s5 = scalar_select 0, %s4, %s2
  $region1: #{tpu_custom_call.1} parent=0
    #allocation2 [shape = 'u8[16384]{0}', space=vmem, size = 0x4000, scoped, tag = 'input window, operand 0']
    #allocation3 [shape = 's32[2]{0}', space=sflag, size = 0x8, scoped, tag = 'scoped memory for tpu_custom_call.1']
    #allocation4 [shape = 's32[2]{0}', space=sflag, size = 0x8, scoped, tag = 'scoped memory for tpu_custom_call.1']
    #allocation5 [shape = 'u8[49152]{0}', space=vmem, size = 0xc000, scoped, tag = 'output window, operand 0']
    %6 = vsyncpa [#allocation3], 0
    %s7 = scalar_lea.sflag [#allocation3], 1
    %8 = vsyncpa %s7, 0
    %9 = vsyncpa [#allocation4], 0
    %s10 = scalar_lea.sflag [#allocation4], 1
    %11 = vsyncpa %s10, 0
    loop: start=0, step=1, limit=10
    $region2: #{tpu_custom_call.1} parent=1 // loop_pre_header
      _
    $region3: #{tpu_custom_call.1} parent=1 // loop_header
      %s13 = sphi 0, %s17
      %p14 = scmp.ge.s32.totalorder %s13, 10
      %s20 = sphi 0, %s32
      %s21 = sphi 0, %s28
      %s22 = sphi 0, %s20
      %s23 = sphi 0, %s21
      %s24 = sphi 0, %s22
      %s25 = sphi 0, %s23
      %s37 = sphi 0, %s39
      %s40 = sphi 0, %s37
      %s41 = sphi 0, %s40
      %s57 = sphi 0, %s41
      %s65 = sphi 0, %s67
      %s68 = sphi 0, %s65
      %s69 = sphi 0, %s68
      %s85 = sphi 0, %s69
    $region4: #{tpu_custom_call.1} parent=1 // loop_header_branch
      %16 = sbr.rel (%p14) target = $region8
    $region5: #{tpu_custom_call.1} parent=1 // loop_body
      %s18 = ssub.s32 %s13, 1
      %s19 = ssub.s32 %s13, 2
      %s26 = sadd.s32 1, %s21
      %p27 = scmp.ge.s32.totalorder %s26, 1
      %s28 = scalar_select %p27, 0, %s26
      %s29 = sadd.s32 1, %s20
      %s30 = scalar_select %p27, %s29, %s20
      %p31 = scmp.ge.s32.totalorder %s30, 8
      %s32 = scalar_select %p31, 0, %s30
      %s33 = ssub.s32 %s20, %s32
      %s34 = ssub.s32 %s21, %s28
      %s35 = sor.u32 %s33, %s34
      %p36 = scmp.eq.s32.totalorder %s35, 0
      %s38 = sadd.s32 %s37, 1
      %s39 = scalar_select %p36, %s37, %s38
      %p42 = pneg %p36
      %p43 = scmp.eq.s32.totalorder %s13, 7
      %p44 = por %p42, %p43
      %p45 = scmp.ne.s32.totalorder %s37, %s40
      %p46 = scmp.eq.s32.totalorder %s13, 0
      %p47 = por %p45, %p46
      %p48 = scmp.ne.s32.totalorder %s37, %s40
      %p49 = scmp.eq.s32.totalorder %s18, 7
      %p50 = por %p48, %p49
      %p51 = scmp.ne.s32.totalorder %s40, %s41
      %p52 = scmp.eq.s32.totalorder %s18, 0
      %p53 = por %p51, %p52
      %p54 = scmp.ne.s32.totalorder %s40, %s41
      %p55 = scmp.eq.s32.totalorder %s19, 7
      %p56 = por %p54, %p55
      %p58 = scmp.ne.s32.totalorder %s41, %s57
      %p59 = scmp.eq.s32.totalorder %s19, 0
      %p60 = por %p58, %p59
      %s61 = ssub.s32 %s20, %s32
      %s62 = ssub.s32 %s21, %s28
      %s63 = sor.u32 %s61, %s62
      %p64 = scmp.eq.s32.totalorder %s63, 0
      %s66 = sadd.s32 %s65, 1
      %s67 = scalar_select %p64, %s65, %s66
      %p70 = pneg %p64
      %p71 = scmp.eq.s32.totalorder %s13, 7
      %p72 = por %p70, %p71
      %p73 = scmp.ne.s32.totalorder %s65, %s68
      %p74 = scmp.eq.s32.totalorder %s13, 0
      %p75 = por %p73, %p74
      %p76 = scmp.ne.s32.totalorder %s65, %s68
      %p77 = scmp.eq.s32.totalorder %s18, 7
      %p78 = por %p76, %p77
      %p79 = scmp.ne.s32.totalorder %s68, %s69
      %p80 = scmp.eq.s32.totalorder %s18, 0
      %p81 = por %p79, %p80
      %p82 = scmp.ne.s32.totalorder %s68, %s69
      %p83 = scmp.eq.s32.totalorder %s19, 7
      %p84 = por %p82, %p83
      %p86 = scmp.ne.s32.totalorder %s69, %s85
      %p87 = scmp.eq.s32.totalorder %s19, 0
      %p88 = por %p86, %p87
      %p89 = scmp.le.s32.totalorder 1, %s13
      %p90 = scmp.lt.s32.totalorder %s13, 9
      %p91 = pnand %p89, %p90
      %p92 = pneg %p91
      // Predicated region
      $region9: #{tpu_custom_call.1} parent=5 // pred_check
        _
      $region10: #{tpu_custom_call.1} parent=5 // pred_check_branch
        %94 = sbr.rel (%p91) target = $region12
      $region11: #{tpu_custom_call.1} parent=5 // pred_region
        %s95 = ssub.s32 %s13, 1
      $region12: #{tpu_custom_call.1} parent=5 // pred_fallthru
        _
      %p96 = scmp.lt.s32.totalorder %s13, 8
      // Predicated region
      $region13: #{tpu_custom_call.1} parent=5 // pred_check
        %p97 = pneg %p96
      $region14: #{tpu_custom_call.1} parent=5 // pred_check_branch
        %99 = sbr.rel (%p97) target = $region16
      $region15: #{tpu_custom_call.1} parent=5 // pred_region
        // Predicated region
        $region17: #{tpu_custom_call.1} parent=15 // pred_check
          %p100 = pneg %p47
        $region18: #{tpu_custom_call.1} parent=15 // pred_check_branch
          %102 = sbr.rel (%p100) target = $region20
        $region19: #{tpu_custom_call.1} parent=15 // pred_region
          %s103 = sand.u32 %s37, 1
          %s104 = scalar_lea.sflag [#allocation3], %s103
          %s105 = sand.u32 %s37, 1
          %s106 = smul.addr %s105, 16
          %s107 = scalar_lea.vmem [#allocation2], %s106
          %s108 = smul.u32 2, %s21
          %s110 = ssub.s32 256, 256
          %111 = vsyncadd %s104, %s110
          %s112 = smul.addr %s20, 2
          %s113 = sadd.s32 %s108, %s112
          %s114 = smul.addr %s113, 128
          %s115 = scalar_lea.hbm %s0, %s114
          %s116 = sshll.u32 %s107, 4
          %s117 = int_to_ptr.vmem [resolvable:$true] %s116
          %122 = dma.hbm_to_vmem [thread:$0]  %s115, 256, %s117, %s104, 128, 128, 8
        $region20: #{tpu_custom_call.1} parent=15 // pred_fallthru
          _
      $region16: #{tpu_custom_call.1} parent=5 // pred_fallthru
        _
      %p123 = scmp.le.s32.totalorder 1, %s13
      %p124 = scmp.lt.s32.totalorder %s13, 9
      %p125 = pnand %p123, %p124
      %p126 = pneg %p125
      // Predicated region
      $region21: #{tpu_custom_call.1} parent=5 // pred_check
        _
      $region22: #{tpu_custom_call.1} parent=5 // pred_check_branch
        %128 = sbr.rel (%p125) target = $region24
      $region23: #{tpu_custom_call.1} parent=5 // pred_region
        %s129 = ssub.s32 %s13, 1
        %s130 = sand.u32 %s40, 1
        %s131 = scalar_lea.sflag [#allocation3], %s130
        %s132 = sand.u32 %s40, 1
        %s133 = smul.addr %s132, 16
        %s134 = scalar_lea.vmem [#allocation2], %s133
        // Predicated region
        $region25: #{tpu_custom_call.1} parent=23 // pred_check
          %p135 = pneg %p53
        $region26: #{tpu_custom_call.1} parent=23 // pred_check_branch
          %137 = sbr.rel (%p135) target = $region28
        $region27: #{tpu_custom_call.1} parent=23 // pred_region
          %138 = dma.done %s131, 256
        $region28: #{tpu_custom_call.1} parent=23 // pred_fallthru
          _
        %s139 = sand.u32 %s40, 1
        %s140 = scalar_lea.sflag [#allocation3], %s139
        %s141 = sand.u32 %s40, 1
        %s142 = smul.addr %s141, 16
        %s143 = scalar_lea.vmem [#allocation2], %s142
        %p144 = pneg %p53
        %p145 = pneg %p50
        %p146 = pneg %p81
        %p147 = pneg %p78
        %s148 = sand.u32 %s68, 1
        %s149 = scalar_lea.sflag [#allocation4], %s148
        %s150 = sand.u32 %s68, 1
        %s151 = smul.addr %s150, 48
        %s152 = scalar_lea.vmem [#allocation5], %s151
        %s153 = smul.u32 2, %s23
        %s154 = smul.u32 2, %s23
        %v155 = vld [vmem:[%s134] sm:$0xff]
        %v156 = vld [vmem:[%s134 + $0x8] sm:$0xff]
        %v157 = vmul.f32 %v155, 0.5
        %v158 = vmul.f32 %v156, 0.5
        %161 = vrot.lane.b32.xlu0 %v157, 1
        %v162 = vpop.permute.xlu0 %161
        %163 = vrot.lane.b32.xlu0 %v158, 1
        %v164 = vpop.permute.xlu0 %163
        %vm167 = vcmask 7168
        %v168 = vsel %vm167, 1.0, %v162
        %v169 = vsel %vm167, 1.0, %v164
        %vm170 = vcmask 138240
        %171 = vst.msk [vmem:[%s152] sm:$0xff] %vm170, %v168
        %172 = vst.msk [vmem:[%s152 + $0x18] sm:$0xff] %vm170, %v169
        %v173 = vmul.f32 %v155, 0.17677669
        %v174 = vmul.f32 %v156, 0.17677669
        %v175 = vlaneseq
        %v176 = vshrl.u32 %v175, 7
        %v177 = vsub.s32 0, %v176
        %v178 = vrot.slane %v173, %v177
        %180 = vbcast.lane.b32.xlu0 %v178, 256
        %v181 = vpop.permute.xlu0 %180
        %s183 = sor.u32 256, 8
        %184 = vbcast.lane.b32.xlu0 %v178, %s183
        %v185 = vpop.permute.xlu0 %184
        %v186 = vlaneseq
        %v187 = vshrl.u32 %v186, 7
        %v188 = vsub.s32 1, %v187
        %v189 = vrot.slane %v173, %v188
        %191 = vbcast.lane.b32.xlu0 %v189, 256
        %v192 = vpop.permute.xlu0 %191
        %s194 = sor.u32 256, 8
        %195 = vbcast.lane.b32.xlu0 %v189, %s194
        %v196 = vpop.permute.xlu0 %195
        %v197 = vlaneseq
        %v198 = vshrl.u32 %v197, 7
        %v199 = vsub.s32 2, %v198
        %v200 = vrot.slane %v173, %v199
        %202 = vbcast.lane.b32.xlu0 %v200, 256
        %v203 = vpop.permute.xlu0 %202
        %s205 = sor.u32 256, 8
        %206 = vbcast.lane.b32.xlu0 %v200, %s205
        %v207 = vpop.permute.xlu0 %206
        %v208 = vlaneseq
        %v209 = vshrl.u32 %v208, 7
        %v210 = vsub.s32 3, %v209
        %v211 = vrot.slane %v173, %v210
        %213 = vbcast.lane.b32.xlu0 %v211, 256
        %v214 = vpop.permute.xlu0 %213
        %s216 = sor.u32 256, 8
        %217 = vbcast.lane.b32.xlu0 %v211, %s216
        %v218 = vpop.permute.xlu0 %217
        %v219 = vlaneseq
        %v220 = vshrl.u32 %v219, 7
        %v221 = vsub.s32 4, %v220
        %v222 = vrot.slane %v173, %v221
        %224 = vbcast.lane.b32.xlu0 %v222, 256
        %v225 = vpop.permute.xlu0 %224
        %s227 = sor.u32 256, 8
        %228 = vbcast.lane.b32.xlu0 %v222, %s227
        %v229 = vpop.permute.xlu0 %228
        %v230 = vlaneseq
        %v231 = vshrl.u32 %v230, 7
        %v232 = vsub.s32 5, %v231
        %v233 = vrot.slane %v173, %v232
        %235 = vbcast.lane.b32.xlu0 %v233, 256
        %v236 = vpop.permute.xlu0 %235
        %s238 = sor.u32 256, 8
        %239 = vbcast.lane.b32.xlu0 %v233, %s238
        %v240 = vpop.permute.xlu0 %239
        %v241 = vlaneseq
        %v242 = vshrl.u32 %v241, 7
        %v243 = vsub.s32 6, %v242
        %v244 = vrot.slane %v173, %v243
        %246 = vbcast.lane.b32.xlu0 %v244, 256
        %v247 = vpop.permute.xlu0 %246
        %s249 = sor.u32 256, 8
        %250 = vbcast.lane.b32.xlu0 %v244, %s249
        %v251 = vpop.permute.xlu0 %250
        %v252 = vlaneseq
        %v253 = vshrl.u32 %v252, 7
        %v254 = vsub.s32 7, %v253
        %v255 = vrot.slane %v173, %v254
        %257 = vbcast.lane.b32.xlu0 %v255, 256
        %v258 = vpop.permute.xlu0 %257
        %s260 = sor.u32 256, 8
        %261 = vbcast.lane.b32.xlu0 %v255, %s260
        %v262 = vpop.permute.xlu0 %261
        %v263 = vlaneseq
        %v264 = vshrl.u32 %v263, 7
        %v265 = vsub.s32 0, %v264
        %v266 = vrot.slane %v174, %v265
        %268 = vbcast.lane.b32.xlu0 %v266, 256
        %v269 = vpop.permute.xlu0 %268
        %s271 = sor.u32 256, 8
        %272 = vbcast.lane.b32.xlu0 %v266, %s271
        %v273 = vpop.permute.xlu0 %272
        %v274 = vlaneseq
        %v275 = vshrl.u32 %v274, 7
        %v276 = vsub.s32 1, %v275
        %v277 = vrot.slane %v174, %v276
        %279 = vbcast.lane.b32.xlu0 %v277, 256
        %v280 = vpop.permute.xlu0 %279
        %s282 = sor.u32 256, 8
        %283 = vbcast.lane.b32.xlu0 %v277, %s282
        %v284 = vpop.permute.xlu0 %283
        %v285 = vlaneseq
        %v286 = vshrl.u32 %v285, 7
        %v287 = vsub.s32 2, %v286
        %v288 = vrot.slane %v174, %v287
        %290 = vbcast.lane.b32.xlu0 %v288, 256
        %v291 = vpop.permute.xlu0 %290
        %s293 = sor.u32 256, 8
        %294 = vbcast.lane.b32.xlu0 %v288, %s293
        %v295 = vpop.permute.xlu0 %294
        %v296 = vlaneseq
        %v297 = vshrl.u32 %v296, 7
        %v298 = vsub.s32 3, %v297
        %v299 = vrot.slane %v174, %v298
        %301 = vbcast.lane.b32.xlu0 %v299, 256
        %v302 = vpop.permute.xlu0 %301
        %s304 = sor.u32 256, 8
        %305 = vbcast.lane.b32.xlu0 %v299, %s304
        %v306 = vpop.permute.xlu0 %305
        %v307 = vlaneseq
        %v308 = vshrl.u32 %v307, 7
        %v309 = vsub.s32 4, %v308
        %v310 = vrot.slane %v174, %v309
        %312 = vbcast.lane.b32.xlu0 %v310, 256
        %v313 = vpop.permute.xlu0 %312
        %s315 = sor.u32 256, 8
        %316 = vbcast.lane.b32.xlu0 %v310, %s315
        %v317 = vpop.permute.xlu0 %316
        %v318 = vlaneseq
        %v319 = vshrl.u32 %v318, 7
        %v320 = vsub.s32 5, %v319
        %v321 = vrot.slane %v174, %v320
        %323 = vbcast.lane.b32.xlu0 %v321, 256
        %v324 = vpop.permute.xlu0 %323
        %s326 = sor.u32 256, 8
        %327 = vbcast.lane.b32.xlu0 %v321, %s326
        %v328 = vpop.permute.xlu0 %327
        %v329 = vlaneseq
        %v330 = vshrl.u32 %v329, 7
        %v331 = vsub.s32 6, %v330
        %v332 = vrot.slane %v174, %v331
        %334 = vbcast.lane.b32.xlu0 %v332, 256
        %v335 = vpop.permute.xlu0 %334
        %s337 = sor.u32 256, 8
        %338 = vbcast.lane.b32.xlu0 %v332, %s337
        %v339 = vpop.permute.xlu0 %338
        %v340 = vlaneseq
        %v341 = vshrl.u32 %v340, 7
        %v342 = vsub.s32 7, %v341
        %v343 = vrot.slane %v174, %v342
        %345 = vbcast.lane.b32.xlu0 %v343, 256
        %v346 = vpop.permute.xlu0 %345
        %s348 = sor.u32 256, 8
        %349 = vbcast.lane.b32.xlu0 %v343, %s348
        %v350 = vpop.permute.xlu0 %349
        %v351 = vcombine.low %v181, %v203
        %v352 = vcombine.high %v181, %v203
        %v354 = vunpack.c.l.s4 1983009808
        %v355 = vunpack.c.0.s8 %v354
        %v356 = vlaneseq
        %v357 = vshrl.u32 %v356, 7
        %v358 = vsub.s32 %v355, %v357
        %v359 = vrot.slane %v351, %v358
        %v361 = vunpack.c.l.s4 1983009808
        %v362 = vunpack.c.0.s8 %v361
        %v363 = vlaneseq
        %v364 = vshrl.u32 %v363, 7
        %v365 = vsub.s32 %v362, %v364
        %v366 = vrot.slane %v352, %v365
        %v367 = vcombine.low %v192, %v214
        %v368 = vcombine.high %v192, %v214
        %v370 = vunpack.c.l.s4 1983009808
        %v371 = vunpack.c.0.s8 %v370
        %v372 = vlaneseq
        %v373 = vshrl.u32 %v372, 7
        %v374 = vsub.s32 %v371, %v373
        %v375 = vrot.slane %v367, %v374
        %v377 = vunpack.c.l.s4 1983009808
        %v378 = vunpack.c.0.s8 %v377
        %v379 = vlaneseq
        %v380 = vshrl.u32 %v379, 7
        %v381 = vsub.s32 %v378, %v380
        %v382 = vrot.slane %v368, %v381
        %v383 = vcombine.low %v225, %v247
        %v384 = vcombine.high %v225, %v247
        %v386 = vunpack.c.l.s4 1983009808
        %v387 = vunpack.c.0.s8 %v386
        %v388 = vlaneseq
        %v389 = vshrl.u32 %v388, 7
        %v390 = vsub.s32 %v387, %v389
        %v391 = vrot.slane %v383, %v390
        %v393 = vunpack.c.l.s4 1983009808
        %v394 = vunpack.c.0.s8 %v393
        %v395 = vlaneseq
        %v396 = vshrl.u32 %v395, 7
        %v397 = vsub.s32 %v394, %v396
        %v398 = vrot.slane %v384, %v397
        %v399 = vcombine.low %v236, %v258
        %v400 = vcombine.high %v236, %v258
        %v402 = vunpack.c.l.s4 1983009808
        %v403 = vunpack.c.0.s8 %v402
        %v404 = vlaneseq
        %v405 = vshrl.u32 %v404, 7
        %v406 = vsub.s32 %v403, %v405
        %v407 = vrot.slane %v399, %v406
        %v409 = vunpack.c.l.s4 1983009808
        %v410 = vunpack.c.0.s8 %v409
        %v411 = vlaneseq
        %v412 = vshrl.u32 %v411, 7
        %v413 = vsub.s32 %v410, %v412
        %v414 = vrot.slane %v400, %v413
        %v415 = vcombine.low %v359, %v375
        %v416 = vcombine.high %v359, %v375
        %v418 = vunpack.c.l.s4 1934713408
        %v419 = vunpack.c.0.s8 %v418
        %v420 = vlaneseq
        %v421 = vshrl.u32 %v420, 7
        %v422 = vsub.s32 %v419, %v421
        %v423 = vrot.slane %v415, %v422
        %v425 = vunpack.c.l.s4 1934713408
        %v426 = vunpack.c.0.s8 %v425
        %v427 = vlaneseq
        %v428 = vshrl.u32 %v427, 7
        %v429 = vsub.s32 %v426, %v428
        %v430 = vrot.slane %v416, %v429
        %v431 = vcombine.low %v366, %v382
        %v432 = vcombine.high %v366, %v382
        %v434 = vunpack.c.l.s4 1934713408
        %v435 = vunpack.c.0.s8 %v434
        %v436 = vlaneseq
        %v437 = vshrl.u32 %v436, 7
        %v438 = vsub.s32 %v435, %v437
        %v439 = vrot.slane %v431, %v438
        %v441 = vunpack.c.l.s4 1934713408
        %v442 = vunpack.c.0.s8 %v441
        %v443 = vlaneseq
        %v444 = vshrl.u32 %v443, 7
        %v445 = vsub.s32 %v442, %v444
        %v446 = vrot.slane %v432, %v445
        %v447 = vcombine.low %v391, %v407
        %v448 = vcombine.high %v391, %v407
        %v450 = vunpack.c.l.s4 1934713408
        %v451 = vunpack.c.0.s8 %v450
        %v452 = vlaneseq
        %v453 = vshrl.u32 %v452, 7
        %v454 = vsub.s32 %v451, %v453
        %v455 = vrot.slane %v447, %v454
        %v457 = vunpack.c.l.s4 1934713408
        %v458 = vunpack.c.0.s8 %v457
        %v459 = vlaneseq
        %v460 = vshrl.u32 %v459, 7
        %v461 = vsub.s32 %v458, %v460
        %v462 = vrot.slane %v448, %v461
        %v463 = vcombine.low %v398, %v414
        %v464 = vcombine.high %v398, %v414
        %v466 = vunpack.c.l.s4 1934713408
        %v467 = vunpack.c.0.s8 %v466
        %v468 = vlaneseq
        %v469 = vshrl.u32 %v468, 7
        %v470 = vsub.s32 %v467, %v469
        %v471 = vrot.slane %v463, %v470
        %v473 = vunpack.c.l.s4 1934713408
        %v474 = vunpack.c.0.s8 %v473
        %v475 = vlaneseq
        %v476 = vshrl.u32 %v475, 7
        %v477 = vsub.s32 %v474, %v476
        %v478 = vrot.slane %v464, %v477
        %v479 = vcombine.low %v423, %v455
        %v480 = vcombine.high %v423, %v455
        %v481 = vcombine.low %v430, %v462
        %v482 = vcombine.high %v430, %v462
        %v483 = vcombine.low %v439, %v471
        %v484 = vcombine.high %v439, %v471
        %v485 = vcombine.low %v446, %v478
        %v486 = vcombine.high %v446, %v478
        %v487 = vcombine.low %v269, %v291
        %v488 = vcombine.high %v269, %v291
        %v490 = vunpack.c.l.s4 1983009808
        %v491 = vunpack.c.0.s8 %v490
        %v492 = vlaneseq
        %v493 = vshrl.u32 %v492, 7
        %v494 = vsub.s32 %v491, %v493
        %v495 = vrot.slane %v487, %v494
        %v497 = vunpack.c.l.s4 1983009808
        %v498 = vunpack.c.0.s8 %v497
        %v499 = vlaneseq
        %v500 = vshrl.u32 %v499, 7
        %v501 = vsub.s32 %v498, %v500
        %v502 = vrot.slane %v488, %v501
        %v503 = vcombine.low %v280, %v302
        %v504 = vcombine.high %v280, %v302
        %v506 = vunpack.c.l.s4 1983009808
        %v507 = vunpack.c.0.s8 %v506
        %v508 = vlaneseq
        %v509 = vshrl.u32 %v508, 7
        %v510 = vsub.s32 %v507, %v509
        %v511 = vrot.slane %v503, %v510
        %v513 = vunpack.c.l.s4 1983009808
        %v514 = vunpack.c.0.s8 %v513
        %v515 = vlaneseq
        %v516 = vshrl.u32 %v515, 7
        %v517 = vsub.s32 %v514, %v516
        %v518 = vrot.slane %v504, %v517
        %v519 = vcombine.low %v313, %v335
        %v520 = vcombine.high %v313, %v335
        %v522 = vunpack.c.l.s4 1983009808
        %v523 = vunpack.c.0.s8 %v522
        %v524 = vlaneseq
        %v525 = vshrl.u32 %v524, 7
        %v526 = vsub.s32 %v523, %v525
        %v527 = vrot.slane %v519, %v526
        %v529 = vunpack.c.l.s4 1983009808
        %v530 = vunpack.c.0.s8 %v529
        %v531 = vlaneseq
        %v532 = vshrl.u32 %v531, 7
        %v533 = vsub.s32 %v530, %v532
        %v534 = vrot.slane %v520, %v533
        %v535 = vcombine.low %v324, %v346
        %v536 = vcombine.high %v324, %v346
        %v538 = vunpack.c.l.s4 1983009808
        %v539 = vunpack.c.0.s8 %v538
        %v540 = vlaneseq
        %v541 = vshrl.u32 %v540, 7
        %v542 = vsub.s32 %v539, %v541
        %v543 = vrot.slane %v535, %v542
        %v545 = vunpack.c.l.s4 1983009808
        %v546 = vunpack.c.0.s8 %v545
        %v547 = vlaneseq
        %v548 = vshrl.u32 %v547, 7
        %v549 = vsub.s32 %v546, %v548
        %v550 = vrot.slane %v536, %v549
        %v551 = vcombine.low %v495, %v511
        %v552 = vcombine.high %v495, %v511
        %v554 = vunpack.c.l.s4 1934713408
        %v555 = vunpack.c.0.s8 %v554
        %v556 = vlaneseq
        %v557 = vshrl.u32 %v556, 7
        %v558 = vsub.s32 %v555, %v557
        %v559 = vrot.slane %v551, %v558
        %v561 = vunpack.c.l.s4 1934713408
        %v562 = vunpack.c.0.s8 %v561
        %v563 = vlaneseq
        %v564 = vshrl.u32 %v563, 7
        %v565 = vsub.s32 %v562, %v564
        %v566 = vrot.slane %v552, %v565
        %v567 = vcombine.low %v502, %v518
        %v568 = vcombine.high %v502, %v518
        %v570 = vunpack.c.l.s4 1934713408
        %v571 = vunpack.c.0.s8 %v570
        %v572 = vlaneseq
        %v573 = vshrl.u32 %v572, 7
        %v574 = vsub.s32 %v571, %v573
        %v575 = vrot.slane %v567, %v574
        %v577 = vunpack.c.l.s4 1934713408
        %v578 = vunpack.c.0.s8 %v577
        %v579 = vlaneseq
        %v580 = vshrl.u32 %v579, 7
        %v581 = vsub.s32 %v578, %v580
        %v582 = vrot.slane %v568, %v581
        %v583 = vcombine.low %v527, %v543
        %v584 = vcombine.high %v527, %v543
        %v586 = vunpack.c.l.s4 1934713408
        %v587 = vunpack.c.0.s8 %v586
        %v588 = vlaneseq
        %v589 = vshrl.u32 %v588, 7
        %v590 = vsub.s32 %v587, %v589
        %v591 = vrot.slane %v583, %v590
        %v593 = vunpack.c.l.s4 1934713408
        %v594 = vunpack.c.0.s8 %v593
        %v595 = vlaneseq
        %v596 = vshrl.u32 %v595, 7
        %v597 = vsub.s32 %v594, %v596
        %v598 = vrot.slane %v584, %v597
        %v599 = vcombine.low %v534, %v550
        %v600 = vcombine.high %v534, %v550
        %v602 = vunpack.c.l.s4 1934713408
        %v603 = vunpack.c.0.s8 %v602
        %v604 = vlaneseq
        %v605 = vshrl.u32 %v604, 7
        %v606 = vsub.s32 %v603, %v605
        %v607 = vrot.slane %v599, %v606
        %v609 = vunpack.c.l.s4 1934713408
        %v610 = vunpack.c.0.s8 %v609
        %v611 = vlaneseq
        %v612 = vshrl.u32 %v611, 7
        %v613 = vsub.s32 %v610, %v612
        %v614 = vrot.slane %v600, %v613
        %v615 = vcombine.low %v559, %v591
        %v616 = vcombine.high %v559, %v591
        %v617 = vcombine.low %v566, %v598
        %v618 = vcombine.high %v566, %v598
        %v619 = vcombine.low %v575, %v607
        %v620 = vcombine.high %v575, %v607
        %v621 = vcombine.low %v582, %v614
        %v622 = vcombine.high %v582, %v614
        %v623 = vcombine.low %v185, %v207
        %v624 = vcombine.high %v185, %v207
        %v626 = vunpack.c.l.s4 1983009808
        %v627 = vunpack.c.0.s8 %v626
        %v628 = vlaneseq
        %v629 = vshrl.u32 %v628, 7
        %v630 = vsub.s32 %v627, %v629
        %v631 = vrot.slane %v623, %v630
        %v633 = vunpack.c.l.s4 1983009808
        %v634 = vunpack.c.0.s8 %v633
        %v635 = vlaneseq
        %v636 = vshrl.u32 %v635, 7
        %v637 = vsub.s32 %v634, %v636
        %v638 = vrot.slane %v624, %v637
        %v639 = vcombine.low %v196, %v218
        %v640 = vcombine.high %v196, %v218
        %v642 = vunpack.c.l.s4 1983009808
        %v643 = vunpack.c.0.s8 %v642
        %v644 = vlaneseq
        %v645 = vshrl.u32 %v644, 7
        %v646 = vsub.s32 %v643, %v645
        %v647 = vrot.slane %v639, %v646
        %v649 = vunpack.c.l.s4 1983009808
        %v650 = vunpack.c.0.s8 %v649
        %v651 = vlaneseq
        %v652 = vshrl.u32 %v651, 7
        %v653 = vsub.s32 %v650, %v652
        %v654 = vrot.slane %v640, %v653
        %v655 = vcombine.low %v229, %v251
        %v656 = vcombine.high %v229, %v251
        %v658 = vunpack.c.l.s4 1983009808
        %v659 = vunpack.c.0.s8 %v658
        %v660 = vlaneseq
        %v661 = vshrl.u32 %v660, 7
        %v662 = vsub.s32 %v659, %v661
        %v663 = vrot.slane %v655, %v662
        %v665 = vunpack.c.l.s4 1983009808
        %v666 = vunpack.c.0.s8 %v665
        %v667 = vlaneseq
        %v668 = vshrl.u32 %v667, 7
        %v669 = vsub.s32 %v666, %v668
        %v670 = vrot.slane %v656, %v669
        %v671 = vcombine.low %v240, %v262
        %v672 = vcombine.high %v240, %v262
        %v674 = vunpack.c.l.s4 1983009808
        %v675 = vunpack.c.0.s8 %v674
        %v676 = vlaneseq
        %v677 = vshrl.u32 %v676, 7
        %v678 = vsub.s32 %v675, %v677
        %v679 = vrot.slane %v671, %v678
        %v681 = vunpack.c.l.s4 1983009808
        %v682 = vunpack.c.0.s8 %v681
        %v683 = vlaneseq
        %v684 = vshrl.u32 %v683, 7
        %v685 = vsub.s32 %v682, %v684
        %v686 = vrot.slane %v672, %v685
        %v687 = vcombine.low %v631, %v647
        %v688 = vcombine.high %v631, %v647
        %v690 = vunpack.c.l.s4 1934713408
        %v691 = vunpack.c.0.s8 %v690
        %v692 = vlaneseq
        %v693 = vshrl.u32 %v692, 7
        %v694 = vsub.s32 %v691, %v693
        %v695 = vrot.slane %v687, %v694
        %v697 = vunpack.c.l.s4 1934713408
        %v698 = vunpack.c.0.s8 %v697
        %v699 = vlaneseq
        %v700 = vshrl.u32 %v699, 7
        %v701 = vsub.s32 %v698, %v700
        %v702 = vrot.slane %v688, %v701
        %v703 = vcombine.low %v638, %v654
        %v704 = vcombine.high %v638, %v654
        %v706 = vunpack.c.l.s4 1934713408
        %v707 = vunpack.c.0.s8 %v706
        %v708 = vlaneseq
        %v709 = vshrl.u32 %v708, 7
        %v710 = vsub.s32 %v707, %v709
        %v711 = vrot.slane %v703, %v710
        %v713 = vunpack.c.l.s4 1934713408
        %v714 = vunpack.c.0.s8 %v713
        %v715 = vlaneseq
        %v716 = vshrl.u32 %v715, 7
        %v717 = vsub.s32 %v714, %v716
        %v718 = vrot.slane %v704, %v717
        %v719 = vcombine.low %v663, %v679
        %v720 = vcombine.high %v663, %v679
        %v722 = vunpack.c.l.s4 1934713408
        %v723 = vunpack.c.0.s8 %v722
        %v724 = vlaneseq
        %v725 = vshrl.u32 %v724, 7
        %v726 = vsub.s32 %v723, %v725
        %v727 = vrot.slane %v719, %v726
        %v729 = vunpack.c.l.s4 1934713408
        %v730 = vunpack.c.0.s8 %v729
        %v731 = vlaneseq
        %v732 = vshrl.u32 %v731, 7
        %v733 = vsub.s32 %v730, %v732
        %v734 = vrot.slane %v720, %v733
        %v735 = vcombine.low %v670, %v686
        %v736 = vcombine.high %v670, %v686
        %v738 = vunpack.c.l.s4 1934713408
        %v739 = vunpack.c.0.s8 %v738
        %v740 = vlaneseq
        %v741 = vshrl.u32 %v740, 7
        %v742 = vsub.s32 %v739, %v741
        %v743 = vrot.slane %v735, %v742
        %v745 = vunpack.c.l.s4 1934713408
        %v746 = vunpack.c.0.s8 %v745
        %v747 = vlaneseq
        %v748 = vshrl.u32 %v747, 7
        %v749 = vsub.s32 %v746, %v748
        %v750 = vrot.slane %v736, %v749
        %v751 = vcombine.low %v695, %v727
        %v752 = vcombine.high %v695, %v727
        %v753 = vcombine.low %v702, %v734
        %v754 = vcombine.high %v702, %v734
        %v755 = vcombine.low %v711, %v743
        %v756 = vcombine.high %v711, %v743
        %v757 = vcombine.low %v718, %v750
        %v758 = vcombine.high %v718, %v750
        %v759 = vcombine.low %v273, %v295
        %v760 = vcombine.high %v273, %v295
        %v762 = vunpack.c.l.s4 1983009808
        %v763 = vunpack.c.0.s8 %v762
        %v764 = vlaneseq
        %v765 = vshrl.u32 %v764, 7
        %v766 = vsub.s32 %v763, %v765
        %v767 = vrot.slane %v759, %v766
        %v769 = vunpack.c.l.s4 1983009808
        %v770 = vunpack.c.0.s8 %v769
        %v771 = vlaneseq
        %v772 = vshrl.u32 %v771, 7
        %v773 = vsub.s32 %v770, %v772
        %v774 = vrot.slane %v760, %v773
        %v775 = vcombine.low %v284, %v306
        %v776 = vcombine.high %v284, %v306
        %v778 = vunpack.c.l.s4 1983009808
        %v779 = vunpack.c.0.s8 %v778
        %v780 = vlaneseq
        %v781 = vshrl.u32 %v780, 7
        %v782 = vsub.s32 %v779, %v781
        %v783 = vrot.slane %v775, %v782
        %v785 = vunpack.c.l.s4 1983009808
        %v786 = vunpack.c.0.s8 %v785
        %v787 = vlaneseq
        %v788 = vshrl.u32 %v787, 7
        %v789 = vsub.s32 %v786, %v788
        %v790 = vrot.slane %v776, %v789
        %v791 = vcombine.low %v317, %v339
        %v792 = vcombine.high %v317, %v339
        %v794 = vunpack.c.l.s4 1983009808
        %v795 = vunpack.c.0.s8 %v794
        %v796 = vlaneseq
        %v797 = vshrl.u32 %v796, 7
        %v798 = vsub.s32 %v795, %v797
        %v799 = vrot.slane %v791, %v798
        %v801 = vunpack.c.l.s4 1983009808
        %v802 = vunpack.c.0.s8 %v801
        %v803 = vlaneseq
        %v804 = vshrl.u32 %v803, 7
        %v805 = vsub.s32 %v802, %v804
        %v806 = vrot.slane %v792, %v805
        %v807 = vcombine.low %v328, %v350
        %v808 = vcombine.high %v328, %v350
        %v810 = vunpack.c.l.s4 1983009808
        %v811 = vunpack.c.0.s8 %v810
        %v812 = vlaneseq
        %v813 = vshrl.u32 %v812, 7
        %v814 = vsub.s32 %v811, %v813
        %v815 = vrot.slane %v807, %v814
        %v817 = vunpack.c.l.s4 1983009808
        %v818 = vunpack.c.0.s8 %v817
        %v819 = vlaneseq
        %v820 = vshrl.u32 %v819, 7
        %v821 = vsub.s32 %v818, %v820
        %v822 = vrot.slane %v808, %v821
        %v823 = vcombine.low %v767, %v783
        %v824 = vcombine.high %v767, %v783
        %v826 = vunpack.c.l.s4 1934713408
        %v827 = vunpack.c.0.s8 %v826
        %v828 = vlaneseq
        %v829 = vshrl.u32 %v828, 7
        %v830 = vsub.s32 %v827, %v829
        %v831 = vrot.slane %v823, %v830
        %v833 = vunpack.c.l.s4 1934713408
        %v834 = vunpack.c.0.s8 %v833
        %v835 = vlaneseq
        %v836 = vshrl.u32 %v835, 7
        %v837 = vsub.s32 %v834, %v836
        %v838 = vrot.slane %v824, %v837
        %v839 = vcombine.low %v774, %v790
        %v840 = vcombine.high %v774, %v790
        %v842 = vunpack.c.l.s4 1934713408
        %v843 = vunpack.c.0.s8 %v842
        %v844 = vlaneseq
        %v845 = vshrl.u32 %v844, 7
        %v846 = vsub.s32 %v843, %v845
        %v847 = vrot.slane %v839, %v846
        %v849 = vunpack.c.l.s4 1934713408
        %v850 = vunpack.c.0.s8 %v849
        %v851 = vlaneseq
        %v852 = vshrl.u32 %v851, 7
        %v853 = vsub.s32 %v850, %v852
        %v854 = vrot.slane %v840, %v853
        %v855 = vcombine.low %v799, %v815
        %v856 = vcombine.high %v799, %v815
        %v858 = vunpack.c.l.s4 1934713408
        %v859 = vunpack.c.0.s8 %v858
        %v860 = vlaneseq
        %v861 = vshrl.u32 %v860, 7
        %v862 = vsub.s32 %v859, %v861
        %v863 = vrot.slane %v855, %v862
        %v865 = vunpack.c.l.s4 1934713408
        %v866 = vunpack.c.0.s8 %v865
        %v867 = vlaneseq
        %v868 = vshrl.u32 %v867, 7
        %v869 = vsub.s32 %v866, %v868
        %v870 = vrot.slane %v856, %v869
        %v871 = vcombine.low %v806, %v822
        %v872 = vcombine.high %v806, %v822
        %v874 = vunpack.c.l.s4 1934713408
        %v875 = vunpack.c.0.s8 %v874
        %v876 = vlaneseq
        %v877 = vshrl.u32 %v876, 7
        %v878 = vsub.s32 %v875, %v877
        %v879 = vrot.slane %v871, %v878
        %v881 = vunpack.c.l.s4 1934713408
        %v882 = vunpack.c.0.s8 %v881
        %v883 = vlaneseq
        %v884 = vshrl.u32 %v883, 7
        %v885 = vsub.s32 %v882, %v884
        %v886 = vrot.slane %v872, %v885
        %v887 = vcombine.low %v831, %v863
        %v888 = vcombine.high %v831, %v863
        %v889 = vcombine.low %v838, %v870
        %v890 = vcombine.high %v838, %v870
        %v891 = vcombine.low %v847, %v879
        %v892 = vcombine.high %v847, %v879
        %v893 = vcombine.low %v854, %v886
        %v894 = vcombine.high %v854, %v886
        %897 = vrot.lane.b32.xlu0 %v480, 16
        %v898 = vpop.permute.xlu0 %897
        %899 = vrot.lane.b32.xlu0 %v616, 16
        %v900 = vpop.permute.xlu0 %899
        %905 = vrot.lane.b32.xlu0 %v481, 32
        %v906 = vpop.permute.xlu0 %905
        %907 = vrot.lane.b32.xlu0 %v617, 32
        %v908 = vpop.permute.xlu0 %907
        %913 = vrot.lane.b32.xlu0 %v482, 48
        %v914 = vpop.permute.xlu0 %913
        %915 = vrot.lane.b32.xlu0 %v618, 48
        %v916 = vpop.permute.xlu0 %915
        %921 = vrot.lane.b32.xlu0 %v483, 64
        %v922 = vpop.permute.xlu0 %921
        %923 = vrot.lane.b32.xlu0 %v619, 64
        %v924 = vpop.permute.xlu0 %923
        %929 = vrot.lane.b32.xlu0 %v484, 80
        %v930 = vpop.permute.xlu0 %929
        %931 = vrot.lane.b32.xlu0 %v620, 80
        %v932 = vpop.permute.xlu0 %931
        %937 = vrot.lane.b32.xlu0 %v485, 96
        %v938 = vpop.permute.xlu0 %937
        %939 = vrot.lane.b32.xlu0 %v621, 96
        %v940 = vpop.permute.xlu0 %939
        %945 = vrot.lane.b32.xlu0 %v486, 112
        %v946 = vpop.permute.xlu0 %945
        %947 = vrot.lane.b32.xlu0 %v622, 112
        %v948 = vpop.permute.xlu0 %947
        %953 = vrot.lane.b32.xlu0 %v752, 16
        %v954 = vpop.permute.xlu0 %953
        %955 = vrot.lane.b32.xlu0 %v888, 16
        %v956 = vpop.permute.xlu0 %955
        %961 = vrot.lane.b32.xlu0 %v753, 32
        %v962 = vpop.permute.xlu0 %961
        %963 = vrot.lane.b32.xlu0 %v889, 32
        %v964 = vpop.permute.xlu0 %963
        %969 = vrot.lane.b32.xlu0 %v754, 48
        %v970 = vpop.permute.xlu0 %969
        %971 = vrot.lane.b32.xlu0 %v890, 48
        %v972 = vpop.permute.xlu0 %971
        %977 = vrot.lane.b32.xlu0 %v755, 64
        %v978 = vpop.permute.xlu0 %977
        %979 = vrot.lane.b32.xlu0 %v891, 64
        %v980 = vpop.permute.xlu0 %979
        %985 = vrot.lane.b32.xlu0 %v756, 80
        %v986 = vpop.permute.xlu0 %985
        %987 = vrot.lane.b32.xlu0 %v892, 80
        %v988 = vpop.permute.xlu0 %987
        %993 = vrot.lane.b32.xlu0 %v757, 96
        %v994 = vpop.permute.xlu0 %993
        %995 = vrot.lane.b32.xlu0 %v893, 96
        %v996 = vpop.permute.xlu0 %995
        %1001 = vrot.lane.b32.xlu0 %v758, 112
        %v1002 = vpop.permute.xlu0 %1001
        %1003 = vrot.lane.b32.xlu0 %v894, 112
        %v1004 = vpop.permute.xlu0 %1003
        %vm1007 = vcmask 130048
        %v1008 = vsel %vm1007, %v479, %v898
        %v1009 = vsel %vm1007, %v615, %v900
        %vm1010 = vcmask 261120
        %v1011 = vsel %vm1010, %v1008, %v906
        %v1012 = vsel %vm1010, %v1009, %v908
        %vm1013 = vcmask 392192
        %v1014 = vsel %vm1013, %v1011, %v914
        %v1015 = vsel %vm1013, %v1012, %v916
        %vm1016 = vcmask 523264
        %v1017 = vsel %vm1016, %v1014, %v922
        %v1018 = vsel %vm1016, %v1015, %v924
        %vm1019 = vcmask 654336
        %v1020 = vsel %vm1019, %v1017, %v930
        %v1021 = vsel %vm1019, %v1018, %v932
        %vm1022 = vcmask 785408
        %v1023 = vsel %vm1022, %v1020, %v938
        %v1024 = vsel %vm1022, %v1021, %v940
        %vm1025 = vcmask 916480
        %v1026 = vsel %vm1025, %v1023, %v946
        %v1027 = vsel %vm1025, %v1024, %v948
        %v1028 = vsel %vm1007, %v751, %v954
        %v1029 = vsel %vm1007, %v887, %v956
        %v1030 = vsel %vm1010, %v1028, %v962
        %v1031 = vsel %vm1010, %v1029, %v964
        %v1032 = vsel %vm1013, %v1030, %v970
        %v1033 = vsel %vm1013, %v1031, %v972
        %v1034 = vsel %vm1016, %v1032, %v978
        %v1035 = vsel %vm1016, %v1033, %v980
        %v1036 = vsel %vm1019, %v1034, %v986
        %v1037 = vsel %vm1019, %v1035, %v988
        %v1038 = vsel %vm1022, %v1036, %v994
        %v1039 = vsel %vm1022, %v1037, %v996
        %v1040 = vsel %vm1025, %v1038, %v1002
        %v1041 = vsel %vm1025, %v1039, %v1004
        %1044 = vrot.lane.b32.xlu0 %v155, 16
        %v1045 = vpop.permute.xlu0 %1044
        %1046 = vrot.lane.b32.xlu0 %v156, 16
        %v1047 = vpop.permute.xlu0 %1046
        %1050 = vrot.lane.b32.xlu0 %v155, 32
        %v1051 = vpop.permute.xlu0 %1050
        %1052 = vrot.lane.b32.xlu0 %v156, 32
        %v1053 = vpop.permute.xlu0 %1052
        %1056 = vrot.lane.b32.xlu0 %v155, 48
        %v1057 = vpop.permute.xlu0 %1056
        %1058 = vrot.lane.b32.xlu0 %v156, 48
        %v1059 = vpop.permute.xlu0 %1058
        %1062 = vrot.lane.b32.xlu0 %v155, 64
        %v1063 = vpop.permute.xlu0 %1062
        %1064 = vrot.lane.b32.xlu0 %v156, 64
        %v1065 = vpop.permute.xlu0 %1064
        %1068 = vrot.lane.b32.xlu0 %v155, 80
        %v1069 = vpop.permute.xlu0 %1068
        %1070 = vrot.lane.b32.xlu0 %v156, 80
        %v1071 = vpop.permute.xlu0 %1070
        %1074 = vrot.lane.b32.xlu0 %v155, 96
        %v1075 = vpop.permute.xlu0 %1074
        %1076 = vrot.lane.b32.xlu0 %v156, 96
        %v1077 = vpop.permute.xlu0 %1076
        %1080 = vrot.lane.b32.xlu0 %v155, 112
        %v1081 = vpop.permute.xlu0 %1080
        %1082 = vrot.lane.b32.xlu0 %v156, 112
        %v1083 = vpop.permute.xlu0 %1082
        %v1086 = vsel %vm1007, %v155, %v1045
        %v1087 = vsel %vm1007, %v156, %v1047
        %v1088 = vsel %vm1010, %v1086, %v1051
        %v1089 = vsel %vm1010, %v1087, %v1053
        %v1090 = vsel %vm1013, %v1088, %v1057
        %v1091 = vsel %vm1013, %v1089, %v1059
        %v1092 = vsel %vm1016, %v1090, %v1063
        %v1093 = vsel %vm1016, %v1091, %v1065
        %v1094 = vsel %vm1019, %v1092, %v1069
        %v1095 = vsel %vm1019, %v1093, %v1071
        %v1096 = vsel %vm1022, %v1094, %v1075
        %v1097 = vsel %vm1022, %v1095, %v1077
        %v1098 = vsel %vm1025, %v1096, %v1081
        %v1099 = vsel %vm1025, %v1097, %v1083
        %v1100 = vmul.f32 %v1026, %v1098
        %v1101 = vmul.f32 %v1040, %v1098
        %v1102 = vmul.f32 %v1027, %v1099
        %v1103 = vmul.f32 %v1041, %v1099
        %1108 = vrot.lane.b32.xlu0 %v1100, 17
        %v1109 = vpop.permute.xlu0 %1108
        %1110 = vrot.lane.b32.xlu0 %v1101, 17
        %v1111 = vpop.permute.xlu0 %1110
        %1112 = vrot.lane.b32.xlu0 %v1102, 17
        %v1113 = vpop.permute.xlu0 %1112
        %1114 = vrot.lane.b32.xlu0 %v1103, 17
        %v1115 = vpop.permute.xlu0 %1114
        %v1116 = vsel %vm170, %v1109, %v1111
        %v1117 = vsel %vm170, %v1113, %v1115
        %vm1124 = vcmask 1047688
        %1125 = vst.msk [vmem:[%s152] sm:$0xff] %vm1124, %v1109
        %1126 = vst [vmem:[%s152 + $0x8] sm:$0xff] %v1116
        %1127 = vst.msk [vmem:[%s152 + $0x10] sm:$0xff] %vm170, %v1111
        %1128 = vst.msk [vmem:[%s152 + $0x18] sm:$0xff] %vm1124, %v1113
        %1129 = vst [vmem:[%s152 + $0x20] sm:$0xff] %v1117
        %1130 = vst.msk [vmem:[%s152 + $0x28] sm:$0xff] %vm170, %v1115
        %s1131 = sand.u32 %s68, 1
        %s1132 = scalar_lea.sflag [#allocation4], %s1131
        %s1133 = sand.u32 %s68, 1
        %s1134 = smul.addr %s1133, 48
        %s1135 = scalar_lea.vmem [#allocation5], %s1134
        // Predicated region
        $region29: #{tpu_custom_call.1} parent=23 // pred_check
          %p1136 = pneg %p78
        $region30: #{tpu_custom_call.1} parent=23 // pred_check_branch
          %1138 = sbr.rel (%p1136) target = $region32
        $region31: #{tpu_custom_call.1} parent=23 // pred_region
          %s1139 = smul.u32 2, %s23
          %s1141 = ssub.s32 768, 768
          %1142 = vsyncadd %s1132, %s1141
          %s1143 = smul.addr %s1139, 3
          %s1144 = smul.addr %s22, 6
          %s1145 = sadd.s32 %s1143, %s1144
          %s1146 = smul.addr %s1145, 128
          %s1147 = scalar_lea.hbm %s1, %s1146
          %s1148 = sshll.u32 %s1135, 4
          %s1149 = int_to_ptr.vmem [resolvable:$true] %s1148
          %1154 = dma.vmem_to_hbm [thread:$0]  %s1149, 768, %s1147, %s1132, 384, 384, 24
        $region32: #{tpu_custom_call.1} parent=23 // pred_fallthru
          _
      $region24: #{tpu_custom_call.1} parent=5 // pred_fallthru
        _
      %p1155 = scmp.le.s32.totalorder 2, %s13
      // Predicated region
      $region33: #{tpu_custom_call.1} parent=5 // pred_check
        %p1156 = pneg %p1155
      $region34: #{tpu_custom_call.1} parent=5 // pred_check_branch
        %1158 = sbr.rel (%p1156) target = $region36
      $region35: #{tpu_custom_call.1} parent=5 // pred_region
        %s1159 = ssub.s32 %s13, 2
        // Predicated region
        $region37: #{tpu_custom_call.1} parent=35 // pred_check
          %p1160 = pneg %p84
        $region38: #{tpu_custom_call.1} parent=35 // pred_check_branch
          %1162 = sbr.rel (%p1160) target = $region40
        $region39: #{tpu_custom_call.1} parent=35 // pred_region
          %s1163 = sand.u32 %s69, 1
          %s1164 = scalar_lea.sflag [#allocation4], %s1163
          %s1165 = sand.u32 %s69, 1
          %s1166 = smul.addr %s1165, 48
          %s1167 = scalar_lea.vmem [#allocation5], %s1166
          %1168 = dma.done %s1164, 768
        $region40: #{tpu_custom_call.1} parent=35 // pred_fallthru
          _
      $region36: #{tpu_custom_call.1} parent=5 // pred_fallthru
        _
    $region6: #{tpu_custom_call.1} parent=1 // loop_footer
      %s17 = sadd.s32 1, %s13
    $region7: #{tpu_custom_call.1} parent=1 // loop_footer_branch
      %12 = sbr.rel target = $region3
    $region8: #{tpu_custom_call.1} parent=1 // loop_exit
      _
    %1169 = vsyncpa [#allocation3], 1
    %s1170 = scalar_lea.sflag [#allocation3], 1
    %1171 = vsyncpa %s1170, 1
    %1172 = vsyncpa [#allocation4], 1
    %s1173 = scalar_lea.sflag [#allocation4], 1
    %1174 = vsyncpa %s1173, 1

</llo_original>
